<compile_context>
chip_gen: v5e
topology: v5e:2x2
jax: 0.10.0
libtpu: 0.0.40
codegen_flags: <defaults>
</compile_context>

<pallas_src>
import math
import functools

import jax
import jax.numpy as jnp
from jax.experimental import pallas as pl
from jax.experimental.pallas import tpu as pltpu


def _round_up(x, m):
    return (x + m - 1) // m * m


def _graphconv_kernel(adj_ref, h_ref, w_ref, b_ref, o_ref, *, add_self,
                      block_rows):
    # adj_ref: (1, TM, Np)   bf16   -- row tile of one graph's adjacency
    # h_ref  : (1, Np, Din)  bf16   -- full node features (resident in VMEM)
    # w_ref  : (Din, Dhp)    bf16   -- resident
    # b_ref  : (1, Dhp)      f32    -- resident
    # o_ref  : (1, TM, Dhp)
    adj = adj_ref[0]                     # (TM, Np)
    h = h_ref[0]                         # (Np, Din)

    # Message passing on the MXU, f32 accumulation.
    ah = jnp.dot(adj, h, preferred_element_type=jnp.float32)     # (TM, Din)

    if add_self:
        # Add this tile's own rows of h exactly once.
        row0 = pl.multiple_of(pl.program_id(1) * block_rows, block_rows)
        h_self = h_ref[0, pl.ds(row0, block_rows), :]
        ah = ah + h_self.astype(jnp.float32)

    # Feature transform: (adj @ h) @ W + b, then ReLU.  Feed the MXU bf16.
    hw = jnp.dot(ah.astype(w_ref.dtype), w_ref[...],
                 preferred_element_type=jnp.float32)              # (TM, Dhp)
    hw = hw + b_ref[...]                                          # (1, Dhp) bcast
    o_ref[0] = jnp.maximum(hw, 0.0).astype(o_ref.dtype)


def graph_conv(adj, h, weight, bias=None, *, add_self=False, block_rows=256,
               compute_dtype=jnp.bfloat16):
    """Pallas TPU implementation of GraphConv.forward (use_mlp=False).

    adj: (B, N, N), h: (B, N, Din), weight: (Din, Dh), bias: (Dh,) or None.
    Returns (B, N, Dh) in h.dtype.
    """
    B, N, _ = adj.shape
    Din = h.shape[-1]
    Dh = weight.shape[-1]
    out_dtype = h.dtype

    if bias is None:
        bias = jnp.zeros((Dh,), dtype=jnp.float32)

    LANE, SUBLANE = 128, 8

    # Lane-dense output: pad feature dim to a multiple of 128 lanes.
    Dh_p = _round_up(Dh, LANE)

    in_bytes = jnp.dtype(compute_dtype).itemsize
    out_bytes = jnp.dtype(out_dtype).itemsize

    # Row tile: multiple of 8 sublanes, shrunk until the double-buffered
    # working set fits a conservative VMEM budget (safe on v5e/v6e/v7x).
    tm = _round_up(min(block_rows, _round_up(N, SUBLANE)), SUBLANE)

    def vmem_bytes(tm_):
        np_ = _round_up(N, tm_)
        return 2 * (tm_ * np_ * in_bytes        # adj tile (double-buffered)
                    + np_ * Din * in_bytes      # resident h
                    + Din * Dh_p * in_bytes     # resident W
                    + Dh_p * 4                  # resident bias
                    + tm_ * Dh_p * out_bytes)   # output tile

    VMEM_BUDGET = 48 * 1024 * 1024
    while tm > SUBLANE and vmem_bytes(tm) > VMEM_BUDGET:
        tm = _round_up(max(SUBLANE, tm // 2), SUBLANE)

    N_p = _round_up(N, tm)

    # Zero-pad: padded adj rows/cols and padded h rows contribute nothing;
    # padded output rows/cols are sliced off below.
    adj_p = jnp.pad(adj, ((0, 0), (0, N_p - N), (0, N_p - N)))
    h_p = jnp.pad(h, ((0, 0), (0, N_p - N), (0, 0)))
    w_p = jnp.pad(weight, ((0, 0), (0, Dh_p - Dh)))
    b_p = jnp.pad(bias.reshape(1, Dh).astype(jnp.float32),
                  ((0, 0), (0, Dh_p - Dh)))

    adj_p = adj_p.astype(compute_dtype)
    h_p = h_p.astype(compute_dtype)
    w_p = w_p.astype(compute_dtype)

    kernel = functools.partial(_graphconv_kernel, add_self=add_self,
                               block_rows=tm)

    cost = pl.CostEstimate(
        flops=2 * B * N_p * (N_p * Din + Din * Dh_p),
        transcendentals=0,
        bytes_accessed=(adj_p.size * in_bytes + h_p.size * in_bytes
                        + w_p.size * in_bytes + b_p.size * 4
                        + B * N_p * Dh_p * out_bytes),
    )

    out_p = pl.pallas_call(
        kernel,
        out_shape=jax.ShapeDtypeStruct((B, N_p, Dh_p), out_dtype),
        grid_spec=pltpu.PrefetchScalarGridSpec(
            num_scalar_prefetch=0,
            grid=(B, N_p // tm),
            in_specs=[
                pl.BlockSpec((1, tm, N_p), lambda b, i: (b, i, 0)),   # adj tile
                pl.BlockSpec((1, N_p, Din), lambda b, i: (b, 0, 0)),  # h (resident)
                pl.BlockSpec((Din, Dh_p), lambda b, i: (0, 0)),       # W (resident)
                pl.BlockSpec((1, Dh_p), lambda b, i: (0, 0)),         # bias
            ],
            out_specs=pl.BlockSpec((1, tm, Dh_p), lambda b, i: (b, i, 0)),
        ),
        compiler_params=pltpu.CompilerParams(
            dimension_semantics=("parallel", "parallel"),
            vmem_limit_bytes=64 * 1024 * 1024,
        ),
        cost_estimate=cost,
    )(adj_p, h_p, w_p, b_p)

    return out_p[:, :N, :Dh]


def init_graphconv_params(key, input_dim, hidden_dim):
    """Deterministic init matching the PyTorch module:
       xavier_uniform_(weight, gain=calculate_gain('relu')); bias = 1e-5."""
    gain = math.sqrt(2.0)  # nn.init.calculate_gain('relu')
    bound = gain * math.sqrt(6.0 / (input_dim + hidden_dim))
    weight = jax.random.uniform(
        key, (input_dim, hidden_dim), dtype=jnp.float32,
        minval=-bound, maxval=bound)
    bias = jnp.full((hidden_dim,), 1e-5, dtype=jnp.float32)
    return weight, bias


if __name__ == "__main__":
    # Small shapes consistent with the module's forward:
    #   adj: (B, N, N), h: (B, N, input_dim)
    B, N, INPUT_DIM, HIDDEN_DIM = 2, 16, 16, 32

    key = jax.random.PRNGKey(0)
    k_adj, k_h, k_w = jax.random.split(key, 3)

    adj = jax.random.uniform(k_adj, (B, N, N), dtype=jnp.float32)
    h = jax.random.normal(k_h, (B, N, INPUT_DIM), dtype=jnp.float32)
    weight, bias = init_graphconv_params(k_w, INPUT_DIM, HIDDEN_DIM)

    # block_rows=8 exercises the row-tiled grid even at this toy N.
    out = graph_conv(adj, h, weight, bias, add_self=False, block_rows=8)
    out = jax.block_until_ready(out)

    # Pure-JAX f32 reference (bf16 MXU operands => loose tolerance).
    ref = jnp.maximum(jnp.einsum("bij,bjd->bid", adj, h) @ weight + bias, 0.0)
    assert out.shape == (B, N, HIDDEN_DIM)
    assert jnp.allclose(out, ref, atol=1e-1, rtol=5e-2)
    rel = jnp.linalg.norm(out - ref) / (jnp.linalg.norm(ref) + 1e-6)
    assert rel < 1e-2

    # add_self path.
    out_s = graph_conv(adj, h, weight, bias, add_self=True, block_rows=8)
    out_s = jax.block_until_ready(out_s)
    ref_s = jnp.maximum(
        (h + jnp.einsum("bij,bjd->bid", adj, h)) @ weight + bias, 0.0)
    assert jnp.allclose(out_s, ref_s, atol=1e-1, rtol=5e-2)
    rel_s = jnp.linalg.norm(out_s - ref_s) / (jnp.linalg.norm(ref_s) + 1e-6)
    assert rel_s < 1e-2

    print("KERNEL_OK")
</pallas_src>

<mosaic_0001>
module attributes {stable_mosaic.version = 11 : i64} {
  func.func @_graphconv_kernel(%arg0: i32, %arg1: i32, %arg2: memref<1x8x16xbf16, #tpu.memory_space<vmem>>, %arg3: memref<1x16x16xbf16, #tpu.memory_space<vmem>>, %arg4: memref<16x128xbf16, #tpu.memory_space<vmem>>, %arg5: memref<1x128xf32, #tpu.memory_space<vmem>>, %arg6: memref<1x8x128xf32, #tpu.memory_space<vmem>>) attributes {dimension_semantics = [#tpu.dimension_semantics<parallel>, #tpu.dimension_semantics<parallel>], iteration_bounds = array<i64: 2, 2>, scalar_prefetch = 0 : i64, scratch_operands = 0 : i64, tpu.core_type = #tpu.core_type<tc>, window_params = [{transform_indices = @transform_0, window_bounds = array<i64: 1, 8, 16>}, {transform_indices = @transform_1, window_bounds = array<i64: 1, 16, 16>}, {pipeline_mode = #tpu.pipeline_mode<synchronous>, transform_indices = @transform_2, window_bounds = array<i64: 16, 128>}, {pipeline_mode = #tpu.pipeline_mode<synchronous>, transform_indices = @transform_3, window_bounds = array<i64: 1, 128>}, {transform_indices = @transform_4, window_bounds = array<i64: 1, 8, 128>}]} {
    %c0 = arith.constant 0 : index
    %c0_0 = arith.constant 0 : index
    %c0_1 = arith.constant 0 : index
    %0 = vector.load %arg2[%c0, %c0_0, %c0_1] : memref<1x8x16xbf16, #tpu.memory_space<vmem>>, vector<1x8x16xbf16>
    %1 = vector.shape_cast %0 : vector<1x8x16xbf16> to vector<8x16xbf16>
    %c0_2 = arith.constant 0 : index
    %c0_3 = arith.constant 0 : index
    %c0_4 = arith.constant 0 : index
    %2 = vector.load %arg3[%c0_2, %c0_3, %c0_4] : memref<1x16x16xbf16, #tpu.memory_space<vmem>>, vector<1x16x16xbf16>
    %3 = vector.shape_cast %2 : vector<1x16x16xbf16> to vector<16x16xbf16>
    %cst = arith.constant dense<0.000000e+00> : vector<8x16xf32>
    %4 = tpu.matmul %1, %3, %cst {dimension_numbers = #tpu.dot_dimension_numbers<[1], [0], [0], [1], [0, 0, 1, 1], [], []>} : vector<8x16xbf16>, vector<16x16xbf16>, vector<8x16xf32> -> vector<8x16xf32>
    %5 = arith.truncf %4 : vector<8x16xf32> to vector<8x16xbf16>
    %c0_5 = arith.constant 0 : index
    %c0_6 = arith.constant 0 : index
    %6 = vector.load %arg4[%c0_5, %c0_6] : memref<16x128xbf16, #tpu.memory_space<vmem>>, vector<16x128xbf16>
    %cst_7 = arith.constant dense<0.000000e+00> : vector<8x128xf32>
    %7 = tpu.matmul %5, %6, %cst_7 {dimension_numbers = #tpu.dot_dimension_numbers<[1], [0], [0], [1], [0, 0, 1, 1], [], []>} : vector<8x16xbf16>, vector<16x128xbf16>, vector<8x128xf32> -> vector<8x128xf32>
    %c0_8 = arith.constant 0 : index
    %c0_9 = arith.constant 0 : index
    %8 = vector.load %arg5[%c0_8, %c0_9] : memref<1x128xf32, #tpu.memory_space<vmem>>, vector<1x128xf32>
    %9 = vector.broadcast %8 : vector<1x128xf32> to vector<8x128xf32>
    %10 = arith.addf %7, %9 : vector<8x128xf32>
    %cst_10 = arith.constant 0.000000e+00 : f32
    %11 = vector.broadcast %cst_10 : f32 to vector<8x128xf32>
    %12 = arith.maximumf %10, %11 : vector<8x128xf32>
    %c0_11 = arith.constant 0 : index
    %c0_12 = arith.constant 0 : index
    %c0_13 = arith.constant 0 : index
    %13 = vector.load %arg6[%c0_11, %c0_12, %c0_13] : memref<1x8x128xf32, #tpu.memory_space<vmem>>, vector<1x8x128xf32>
    %14 = vector.shape_cast %13 : vector<1x8x128xf32> to vector<8x128xf32>
    %15 = vector.shape_cast %12 : vector<8x128xf32> to vector<1x8x128xf32>
    tpu.vector_store %arg6[%c0_11, %c0_12, %c0_13], %15 {strides = array<i32>} : memref<1x8x128xf32, #tpu.memory_space<vmem>>, vector<1x8x128xf32>,
    return
  }
  func.func @transform_0(%arg0: i32, %arg1: i32) -> (i32, i32, i32) {
    %c0_i32 = arith.constant 0 : i32
    %c0_i32_0 = arith.constant 0 : i32
    return %arg0, %arg1, %c0_i32 : i32, i32, i32
  }
  func.func @transform_1(%arg0: i32, %arg1: i32) -> (i32, i32, i32) {
    %c0_i32 = arith.constant 0 : i32
    %c0_i32_0 = arith.constant 0 : i32
    %c0_i32_1 = arith.constant 0 : i32
    return %arg0, %c0_i32, %c0_i32_0 : i32, i32, i32
  }
  func.func @transform_2(%arg0: i32, %arg1: i32) -> (i32, i32) {
    %c0_i32 = arith.constant 0 : i32
    %c0_i32_0 = arith.constant 0 : i32
    %c0_i32_1 = arith.constant 0 : i32
    return %c0_i32, %c0_i32_0 : i32, i32
  }
  func.func @transform_3(%arg0: i32, %arg1: i32) -> (i32, i32) {
    %c0_i32 = arith.constant 0 : i32
    %c0_i32_0 = arith.constant 0 : i32
    %c0_i32_1 = arith.constant 0 : i32
    return %c0_i32, %c0_i32_0 : i32, i32
  }
  func.func @transform_4(%arg0: i32, %arg1: i32) -> (i32, i32, i32) {
    %c0_i32 = arith.constant 0 : i32
    %c0_i32_0 = arith.constant 0 : i32
    return %arg0, %arg1, %c0_i32 : i32, i32, i32
  }
}

</mosaic_0001>

<llo_original>
// kernel: tpu_custom_call.1
$region0: #{tpu_custom_call.1}
  #allocation0 [shape = 'u32[]', space=smem, size = 0x4, offset = 0x4, fixed_abs, tag = 'smem constant byte address 0x4 - core index']
  #allocation1 [shape = 'u32[72,128]{1,0:T(1,128)}', space=vmem, size = 0x9000, scoped, tag = 'internal scratch']
  %s0 = inlined_call_operand.hbm [shape: bf16[2,16,16], index: 0, kind: input, shape index: {}]
  %s1 = inlined_call_operand.hbm [shape: bf16[2,16,16], index: 1, kind: input, shape index: {}]
  %s2 = inlined_call_operand.hbm [shape: bf16[16,128], index: 2, kind: input, shape index: {}]
  %s3 = inlined_call_operand.vmem [shape: f32[1,128], index: 3, kind: input, shape index: {}]
  %s4 = inlined_call_operand.hbm [shape: f32[2,16,128], index: 4, kind: output, shape index: {}]
  %s5 = sld [smem:[#allocation0]]
  $region61: #{tpu_custom_call.1} parent=0
    _
  %s7 = ssub.s32 1, %s5
  %s8 = scalar_select 0, %s7, %s5
  $region1: #{tpu_custom_call.1} parent=0
    #allocation2 [shape = 'u8[4096]{0}', space=vmem, size = 0x1000, scoped, tag = 'input window, operand 0']
    #allocation3 [shape = 's32[2]{0}', space=sflag, size = 0x8, scoped, tag = 'scoped memory for tpu_custom_call.1']
    #allocation4 [shape = 's32[2]{0}', space=sflag, size = 0x8, scoped, tag = 'scoped memory for tpu_custom_call.1']
    #allocation5 [shape = 'u8[8192]{0}', space=vmem, size = 0x2000, scoped, tag = 'input window, operand 1']
    #allocation6 [shape = 's32[2]{0}', space=sflag, size = 0x8, scoped, tag = 'scoped memory for tpu_custom_call.1']
    #allocation7 [shape = 'u8[4096]{0}', space=vmem, size = 0x1000, scoped, tag = 'input window, operand 2, single buffered']
    #allocation8 [shape = 'u8[8192]{0}', space=vmem, size = 0x2000, scoped, tag = 'output window, operand 0']
    %9 = vsyncpa [#allocation3], 0
    %s10 = scalar_lea.sflag [#allocation3], 1
    %11 = vsyncpa %s10, 0
    %12 = vsyncpa [#allocation6], 0
    %s13 = scalar_lea.sflag [#allocation6], 1
    %14 = vsyncpa %s13, 0
    %15 = vsyncpa [#allocation4], 0
    %s16 = scalar_lea.sflag [#allocation4], 1
    %17 = vsyncpa %s16, 0
    loop: start=0, step=1, limit=6
    $region2: #{tpu_custom_call.1} parent=1 // loop_pre_header
      _
    $region3: #{tpu_custom_call.1} parent=1 // loop_header
      %s19 = sphi 0, %s23
      %p20 = scmp.ge.s32.totalorder %s19, 6
      %s26 = sphi 0, %s38
      %s27 = sphi 0, %s34
      %s28 = sphi 0, %s26
      %s29 = sphi 0, %s27
      %s30 = sphi 0, %s28
      %s31 = sphi 0, %s29
      %s43 = sphi 0, %s45
      %s46 = sphi 0, %s43
      %s47 = sphi 0, %s46
      %s63 = sphi 0, %s47
      %s69 = sphi 0, %s71
      %s72 = sphi 0, %s69
      %s73 = sphi 0, %s72
      %s89 = sphi 0, %s73
      %s93 = sphi 0, %s93
      %s95 = sphi 0, %s93
      %s96 = sphi 0, %s95
      %s110 = sphi 0, %s96
      %s114 = sphi 0, %s114
      %s116 = sphi 0, %s114
      %s117 = sphi 0, %s116
      %s131 = sphi 0, %s117
      %s139 = sphi 0, %s141
      %s142 = sphi 0, %s139
      %s143 = sphi 0, %s142
      %s159 = sphi 0, %s143
    $region4: #{tpu_custom_call.1} parent=1 // loop_header_branch
      %22 = sbr.rel (%p20) target = $region8
    $region5: #{tpu_custom_call.1} parent=1 // loop_body
      %s24 = ssub.s32 %s19, 1
      %s25 = ssub.s32 %s19, 2
      %s32 = sadd.s32 1, %s27
      %p33 = scmp.ge.s32.totalorder %s32, 2
      %s34 = scalar_select %p33, 0, %s32
      %s35 = sadd.s32 1, %s26
      %s36 = scalar_select %p33, %s35, %s26
      %p37 = scmp.ge.s32.totalorder %s36, 2
      %s38 = scalar_select %p37, 0, %s36
      %s39 = ssub.s32 %s26, %s38
      %s40 = ssub.s32 %s27, %s34
      %s41 = sor.u32 %s39, %s40
      %p42 = scmp.eq.s32.totalorder %s41, 0
      %s44 = sadd.s32 %s43, 1
      %s45 = scalar_select %p42, %s43, %s44
      %p48 = pneg %p42
      %p49 = scmp.eq.s32.totalorder %s19, 3
      %p50 = por %p48, %p49
      %p51 = scmp.ne.s32.totalorder %s43, %s46
      %p52 = scmp.eq.s32.totalorder %s19, 0
      %p53 = por %p51, %p52
      %p54 = scmp.ne.s32.totalorder %s43, %s46
      %p55 = scmp.eq.s32.totalorder %s24, 3
      %p56 = por %p54, %p55
      %p57 = scmp.ne.s32.totalorder %s46, %s47
      %p58 = scmp.eq.s32.totalorder %s24, 0
      %p59 = por %p57, %p58
      %p60 = scmp.ne.s32.totalorder %s46, %s47
      %p61 = scmp.eq.s32.totalorder %s25, 3
      %p62 = por %p60, %p61
      %p64 = scmp.ne.s32.totalorder %s47, %s63
      %p65 = scmp.eq.s32.totalorder %s25, 0
      %p66 = por %p64, %p65
      %s67 = ssub.s32 %s26, %s38
      %p68 = scmp.eq.s32.totalorder %s67, 0
      %s70 = sadd.s32 %s69, 1
      %s71 = scalar_select %p68, %s69, %s70
      %p74 = pneg %p68
      %p75 = scmp.eq.s32.totalorder %s19, 3
      %p76 = por %p74, %p75
      %p77 = scmp.ne.s32.totalorder %s69, %s72
      %p78 = scmp.eq.s32.totalorder %s19, 0
      %p79 = por %p77, %p78
      %p80 = scmp.ne.s32.totalorder %s69, %s72
      %p81 = scmp.eq.s32.totalorder %s24, 3
      %p82 = por %p80, %p81
      %p83 = scmp.ne.s32.totalorder %s72, %s73
      %p84 = scmp.eq.s32.totalorder %s24, 0
      %p85 = por %p83, %p84
      %p86 = scmp.ne.s32.totalorder %s72, %s73
      %p87 = scmp.eq.s32.totalorder %s25, 3
      %p88 = por %p86, %p87
      %p90 = scmp.ne.s32.totalorder %s73, %s89
      %p91 = scmp.eq.s32.totalorder %s25, 0
      %p92 = por %p90, %p91
      %s94 = sadd.s32 %s93, 1
      %p97 = scmp.eq.s32.totalorder %s19, 3
      %p98 = scmp.ne.s32.totalorder %s93, %s95
      %p99 = scmp.eq.s32.totalorder %s19, 0
      %p100 = por %p98, %p99
      %p101 = scmp.ne.s32.totalorder %s93, %s95
      %p102 = scmp.eq.s32.totalorder %s24, 3
      %p103 = por %p101, %p102
      %p104 = scmp.ne.s32.totalorder %s95, %s96
      %p105 = scmp.eq.s32.totalorder %s24, 0
      %p106 = por %p104, %p105
      %p107 = scmp.ne.s32.totalorder %s95, %s96
      %p108 = scmp.eq.s32.totalorder %s25, 3
      %p109 = por %p107, %p108
      %p111 = scmp.ne.s32.totalorder %s96, %s110
      %p112 = scmp.eq.s32.totalorder %s25, 0
      %p113 = por %p111, %p112
      %s115 = sadd.s32 %s114, 1
      %p118 = scmp.eq.s32.totalorder %s19, 3
      %p119 = scmp.ne.s32.totalorder %s114, %s116
      %p120 = scmp.eq.s32.totalorder %s19, 0
      %p121 = por %p119, %p120
      %p122 = scmp.ne.s32.totalorder %s114, %s116
      %p123 = scmp.eq.s32.totalorder %s24, 3
      %p124 = por %p122, %p123
      %p125 = scmp.ne.s32.totalorder %s116, %s117
      %p126 = scmp.eq.s32.totalorder %s24, 0
      %p127 = por %p125, %p126
      %p128 = scmp.ne.s32.totalorder %s116, %s117
      %p129 = scmp.eq.s32.totalorder %s25, 3
      %p130 = por %p128, %p129
      %p132 = scmp.ne.s32.totalorder %s117, %s131
      %p133 = scmp.eq.s32.totalorder %s25, 0
      %p134 = por %p132, %p133
      %s135 = ssub.s32 %s26, %s38
      %s136 = ssub.s32 %s27, %s34
      %s137 = sor.u32 %s135, %s136
      %p138 = scmp.eq.s32.totalorder %s137, 0
      %s140 = sadd.s32 %s139, 1
      %s141 = scalar_select %p138, %s139, %s140
      %p144 = pneg %p138
      %p145 = scmp.eq.s32.totalorder %s19, 3
      %p146 = por %p144, %p145
      %p147 = scmp.ne.s32.totalorder %s139, %s142
      %p148 = scmp.eq.s32.totalorder %s19, 0
      %p149 = por %p147, %p148
      %p150 = scmp.ne.s32.totalorder %s139, %s142
      %p151 = scmp.eq.s32.totalorder %s24, 3
      %p152 = por %p150, %p151
      %p153 = scmp.ne.s32.totalorder %s142, %s143
      %p154 = scmp.eq.s32.totalorder %s24, 0
      %p155 = por %p153, %p154
      %p156 = scmp.ne.s32.totalorder %s142, %s143
      %p157 = scmp.eq.s32.totalorder %s25, 3
      %p158 = por %p156, %p157
      %p160 = scmp.ne.s32.totalorder %s143, %s159
      %p161 = scmp.eq.s32.totalorder %s25, 0
      %p162 = por %p160, %p161
      %p163 = scmp.le.s32.totalorder 1, %s19
      %p164 = scmp.lt.s32.totalorder %s19, 5
      %p165 = pnand %p163, %p164
      %p166 = pneg %p165
      // Predicated region
      $region9: #{tpu_custom_call.1} parent=5 // pred_check
        _
      $region10: #{tpu_custom_call.1} parent=5 // pred_check_branch
        %168 = sbr.rel (%p165) target = $region12
      $region11: #{tpu_custom_call.1} parent=5 // pred_region
        %s169 = ssub.s32 %s19, 1
        // Predicated region
        $region13: #{tpu_custom_call.1} parent=11 // pred_check
          %p170 = pneg %p106
        $region14: #{tpu_custom_call.1} parent=11 // pred_check_branch
          %172 = sbr.rel (%p170) target = $region16
        $region15: #{tpu_custom_call.1} parent=11 // pred_region
          %174 = vsyncadd [#allocation6], 0
          %s175 = sshll.u32 %s2, 4
          %s176 = int_to_ptr.hbm [resolvable:$true] %s175
          %s177 = sshll.u32 [#allocation7], 4
          %s178 = int_to_ptr.vmem [resolvable:$true] %s177
          %183 = dma.hbm_to_vmem [thread:$0]  %s176, 128, %s178, [#allocation6], 64, 64, 4
        $region16: #{tpu_custom_call.1} parent=11 // pred_fallthru
          _
        // Predicated region
        $region17: #{tpu_custom_call.1} parent=11 // pred_check
          %p184 = pneg %p127
        $region18: #{tpu_custom_call.1} parent=11 // pred_check_branch
          %186 = sbr.rel (%p184) target = $region20
        $region19: #{tpu_custom_call.1} parent=11 // pred_region
          _
        $region20: #{tpu_custom_call.1} parent=11 // pred_fallthru
          _
      $region12: #{tpu_custom_call.1} parent=5 // pred_fallthru
        _
      %p187 = scmp.lt.s32.totalorder %s19, 4
      // Predicated region
      $region21: #{tpu_custom_call.1} parent=5 // pred_check
        %p188 = pneg %p187
      $region22: #{tpu_custom_call.1} parent=5 // pred_check_branch
        %190 = sbr.rel (%p188) target = $region24
      $region23: #{tpu_custom_call.1} parent=5 // pred_region
        // Predicated region
        $region25: #{tpu_custom_call.1} parent=23 // pred_check
          %p191 = pneg %p53
        $region26: #{tpu_custom_call.1} parent=23 // pred_check_branch
          %193 = sbr.rel (%p191) target = $region28
        $region27: #{tpu_custom_call.1} parent=23 // pred_region
          %s194 = sand.u32 %s43, 1
          %s195 = scalar_lea.sflag [#allocation3], %s194
          %s196 = sand.u32 %s43, 1
          %s197 = smul.addr %s196, 4
          %s198 = scalar_lea.vmem [#allocation2], %s197
          %200 = vsyncadd %s195, 0
          %s201 = smul.addr %s26, 2
          %s202 = sadd.s32 %s27, %s201
          %s203 = smul.addr %s202, 4
          %s204 = scalar_lea.hbm %s0, %s203
          %s206 = sshll.u32 %s204, 4
          %s207 = int_to_ptr.hbm [resolvable:$true] %s206
          %s208 = sshll.u32 %s198, 4
          %s209 = int_to_ptr.vmem [resolvable:$true] %s208
          %211 = dma.hbm_to_vmem [thread:$0]  %s207, 64, %s209, %s195
        $region28: #{tpu_custom_call.1} parent=23 // pred_fallthru
          _
        // Predicated region
        $region29: #{tpu_custom_call.1} parent=23 // pred_check
          %p212 = pneg %p79
        $region30: #{tpu_custom_call.1} parent=23 // pred_check_branch
          %214 = sbr.rel (%p212) target = $region32
        $region31: #{tpu_custom_call.1} parent=23 // pred_region
          %s215 = sand.u32 %s19, 1
          %s216 = scalar_lea.sflag [#allocation6], %s215
          %s217 = sand.u32 %s69, 1
          %s218 = smul.addr %s217, 8
          %s219 = scalar_lea.vmem [#allocation5], %s218
          %221 = vsyncadd %s216, 0
          %s222 = smul.addr %s26, 2
          %s223 = smul.addr %s222, 4
          %s224 = scalar_lea.hbm %s1, %s223
          %s225 = sshll.u32 %s224, 4
          %s226 = int_to_ptr.hbm [resolvable:$true] %s225
          %s227 = sshll.u32 %s219, 4
          %s228 = int_to_ptr.vmem [resolvable:$true] %s227
          %233 = dma.hbm_to_vmem [thread:$0]  %s226, 128, %s228, %s216, 64, 64, 4
        $region32: #{tpu_custom_call.1} parent=23 // pred_fallthru
          _
      $region24: #{tpu_custom_call.1} parent=5 // pred_fallthru
        _
      %p234 = scmp.le.s32.totalorder 1, %s19
      %p235 = scmp.lt.s32.totalorder %s19, 5
      %p236 = pnand %p234, %p235
      %p237 = pneg %p236
      // Predicated region
      $region33: #{tpu_custom_call.1} parent=5 // pred_check
        _
      $region34: #{tpu_custom_call.1} parent=5 // pred_check_branch
        %239 = sbr.rel (%p236) target = $region36
      $region35: #{tpu_custom_call.1} parent=5 // pred_region
        %s240 = ssub.s32 %s19, 1
        %s241 = sand.u32 %s46, 1
        %s242 = scalar_lea.sflag [#allocation3], %s241
        %s243 = sand.u32 %s46, 1
        %s244 = smul.addr %s243, 4
        %s245 = scalar_lea.vmem [#allocation2], %s244
        // Predicated region
        $region37: #{tpu_custom_call.1} parent=35 // pred_check
          %p246 = pneg %p59
        $region38: #{tpu_custom_call.1} parent=35 // pred_check_branch
          %248 = sbr.rel (%p246) target = $region40
        $region39: #{tpu_custom_call.1} parent=35 // pred_region
          %250 = dma.done %s242, 64
        $region40: #{tpu_custom_call.1} parent=35 // pred_fallthru
          _
        %s251 = sand.u32 %s24, 1
        %s252 = scalar_lea.sflag [#allocation6], %s251
        %s253 = sand.u32 %s72, 1
        %s254 = smul.addr %s253, 8
        %s255 = scalar_lea.vmem [#allocation5], %s254
        // Predicated region
        $region41: #{tpu_custom_call.1} parent=35 // pred_check
          %p256 = pneg %p85
        $region42: #{tpu_custom_call.1} parent=35 // pred_check_branch
          %258 = sbr.rel (%p256) target = $region44
        $region43: #{tpu_custom_call.1} parent=35 // pred_region
          %260 = dma.done %s252, 128
        $region44: #{tpu_custom_call.1} parent=35 // pred_fallthru
          _
        // Predicated region
        $region45: #{tpu_custom_call.1} parent=35 // pred_check
          %p261 = pneg %p106
        $region46: #{tpu_custom_call.1} parent=35 // pred_check_branch
          %263 = sbr.rel (%p261) target = $region48
        $region47: #{tpu_custom_call.1} parent=35 // pred_region
          %265 = dma.done [#allocation6], 128
        $region48: #{tpu_custom_call.1} parent=35 // pred_fallthru
          _
        %s266 = sand.u32 %s46, 1
        %s267 = scalar_lea.sflag [#allocation3], %s266
        %s268 = sand.u32 %s46, 1
        %s269 = smul.addr %s268, 4
        %s270 = scalar_lea.vmem [#allocation2], %s269
        %p271 = pneg %p59
        %p272 = pneg %p56
        %s273 = sand.u32 %s24, 1
        %s274 = scalar_lea.sflag [#allocation6], %s273
        %s275 = sand.u32 %s72, 1
        %s276 = smul.addr %s275, 8
        %s277 = scalar_lea.vmem [#allocation5], %s276
        %p278 = pneg %p85
        %p279 = pneg %p82
        %p280 = pneg %p106
        %p281 = pneg %p103
        %p282 = pneg %p127
        %p283 = pneg %p124
        %p284 = pneg %p155
        %p285 = pneg %p152
        %s286 = sand.u32 %s142, 1
        %s287 = scalar_lea.sflag [#allocation4], %s286
        %s288 = sand.u32 %s142, 1
        %s289 = smul.addr %s288, 8
        %s290 = scalar_lea.vmem [#allocation8], %s289
        %v292 = vld [vmem:[%s245] sm:$0xf]
        %v293 = vld [vmem:[%s255] sm:$0xf]
        %v294 = vld [vmem:[%s255 + $0x4] sm:$0xf]
        %v297 = vunpack.c.l.b16 %v293
        %v298 = vunpack.c.l.b16 %v294
        %v299 = vpack.c.b16 %v298, %v297
        %vm301 = vcmask 130048
        %v303 = vsel %vm301, %v292, 0
        %305 = vmatpush.bf16.msra.mxu0 0
        %306 = vmatpush.bf16.msra.mxu0 0
        %307 = vmatpush.bf16.msra.mxu0 0
        %308 = vmatpush.bf16.msra.mxu0 0
        %309 = vmatpush.bf16.msra.mxu0 0
        %310 = vmatpush.bf16.msra.mxu0 0
        %311 = vmatpush.bf16.msra.mxu0 0
        %312 = vmatpush.bf16.msra.mxu0 %v299
        %313 = vmatmul.bf16.gmra.mxu0 %v303
        %v314 = vpop.f32.mrf.mxu0
        %v315 = vadd.f32 0.0, %v314
        %v316 = vpop.f32.mrf.mxu0
        %317 = vdwg.mxu0
        %v318 = vpack.c.bf16 %v315, %v315
        %v319 = vld [vmem:[#allocation7] sm:$0xf]
        %v320 = vld [vmem:[#allocation7 + $0x4] sm:$0xf]
        %v321 = vld [vmem:[%s3] sm:$0x1]
        %v323 = vperm.slane %v321, 0
        %v327 = vunpack.c.l.b16 %v319
        %v328 = vunpack.c.l.b16 %v320
        %v329 = vpack.c.b16 %v328, %v327
        %v332 = vsel %vm301, %v318, 0
        %334 = vmatpush.bf16.msra.mxu0 0
        %335 = vmatpush.bf16.msra.mxu0 0
        %336 = vmatpush.bf16.msra.mxu0 0
        %337 = vmatpush.bf16.msra.mxu0 0
        %338 = vmatpush.bf16.msra.mxu0 0
        %339 = vmatpush.bf16.msra.mxu0 0
        %340 = vmatpush.bf16.msra.mxu0 0
        %341 = vmatpush.bf16.msra.mxu0 %v329
        %342 = vmatmul.bf16.gmra.mxu0 %v332
        %v343 = vpop.f32.mrf.mxu0
        %v344 = vadd.f32 %v323, %v343
        %v345 = vpop.f32.mrf.mxu0
        %346 = vdwg.mxu0
        %v347 = vmax.f32 %v344, 0.0
        %348 = vst [vmem:[%s290] sm:$0xff] %v347
        %s349 = sand.u32 %s142, 1
        %s350 = scalar_lea.sflag [#allocation4], %s349
        %s351 = sand.u32 %s142, 1
        %s352 = smul.addr %s351, 8
        %s353 = scalar_lea.vmem [#allocation8], %s352
        // Predicated region
        $region49: #{tpu_custom_call.1} parent=35 // pred_check
          %p354 = pneg %p152
        $region50: #{tpu_custom_call.1} parent=35 // pred_check_branch
          %356 = sbr.rel (%p354) target = $region52
        $region51: #{tpu_custom_call.1} parent=35 // pred_region
          %358 = vsyncadd %s350, 0
          %s359 = smul.addr %s28, 2
          %s360 = sadd.s32 %s29, %s359
          %s361 = smul.addr %s360, 8
          %s362 = scalar_lea.hbm %s4, %s361
          %s364 = sshll.u32 %s353, 4
          %s365 = int_to_ptr.vmem [resolvable:$true] %s364
          %s366 = sshll.u32 %s362, 4
          %s367 = int_to_ptr.hbm [resolvable:$true] %s366
          %369 = dma.vmem_to_hbm [thread:$0]  %s365, 128, %s367, %s350
        $region52: #{tpu_custom_call.1} parent=35 // pred_fallthru
          _
      $region36: #{tpu_custom_call.1} parent=5 // pred_fallthru
        _
      %p370 = scmp.le.s32.totalorder 2, %s19
      // Predicated region
      $region53: #{tpu_custom_call.1} parent=5 // pred_check
        %p371 = pneg %p370
      $region54: #{tpu_custom_call.1} parent=5 // pred_check_branch
        %373 = sbr.rel (%p371) target = $region56
      $region55: #{tpu_custom_call.1} parent=5 // pred_region
        %s374 = ssub.s32 %s19, 2
        // Predicated region
        $region57: #{tpu_custom_call.1} parent=55 // pred_check
          %p375 = pneg %p158
        $region58: #{tpu_custom_call.1} parent=55 // pred_check_branch
          %377 = sbr.rel (%p375) target = $region60
        $region59: #{tpu_custom_call.1} parent=55 // pred_region
          %s378 = sand.u32 %s143, 1
          %s379 = scalar_lea.sflag [#allocation4], %s378
          %s380 = sand.u32 %s143, 1
          %s381 = smul.addr %s380, 8
          %s382 = scalar_lea.vmem [#allocation8], %s381
          %384 = dma.done %s379, 128
        $region60: #{tpu_custom_call.1} parent=55 // pred_fallthru
          _
      $region56: #{tpu_custom_call.1} parent=5 // pred_fallthru
        _
    $region6: #{tpu_custom_call.1} parent=1 // loop_footer
      %s23 = sadd.s32 1, %s19
    $region7: #{tpu_custom_call.1} parent=1 // loop_footer_branch
      %18 = sbr.rel target = $region3
    $region8: #{tpu_custom_call.1} parent=1 // loop_exit
      _
    %385 = vsyncpa [#allocation3], 1
    %s386 = scalar_lea.sflag [#allocation3], 1
    %387 = vsyncpa %s386, 1
    %388 = vsyncpa [#allocation6], 1
    %s389 = scalar_lea.sflag [#allocation6], 1
    %390 = vsyncpa %s389, 1
    %391 = vsyncpa [#allocation4], 1
    %s392 = scalar_lea.sflag [#allocation4], 1
    %393 = vsyncpa %s392, 1

</llo_original>
